<compile_context>
chip_gen: v7x
topology: tpu7x:2x2x1
jax: 0.10.0
libtpu: 0.0.40
codegen_flags: <defaults>
</compile_context>

<pallas_src>
import jax
import jax.numpy as jnp
from jax.experimental import pallas as pl
from jax.experimental.pallas import tpu as pltpu


# ---------------------------------------------------------------------------
# Kernels
# ---------------------------------------------------------------------------
def compression_gx0_kernel(x_ref, wc_ref, bc_ref, w0_ref, xh_ref, gx0_ref):
    # xh = relu(x @ Wc + bc)  (bf16 out);  gx0 = xh @ W_ih_0^T  (hoisted layer-0
    # input-to-hidden matmul, f32 out).  bf16 dot inputs, f32 accumulation.
    xh = jnp.maximum(
        jnp.dot(x_ref[...].astype(wc_ref.dtype), wc_ref[...],
                preferred_element_type=jnp.float32) + bc_ref[...], 0.0)
    xh_bf = xh.astype(jnp.bfloat16)
    xh_ref[...] = xh_bf
    gx0_ref[...] = jnp.dot(xh_bf, w0_ref[...],
                           preferred_element_type=jnp.float32)


def lstm_stack_kernel(gx0_ref, w0_ref, w_ref, b_ref, out_ref, h_sc, c_sc):
    # TT timesteps of the FULL L-layer LSTM stack per grid step.
    #   gx0_ref: (TT, B, 4H) f32   precomputed layer-0 input gates (no bias)
    #   w0_ref:  (H, 4H)     bf16  layer-0 W_hh^T, resident
    #   w_ref:   (L-1,2H,4H) bf16  fused [W_ih^T ; W_hh^T] layers 1..L-1, resident
    #   b_ref:   (L, 1, 4H)  f32   folded b_ih + b_hh per layer, resident
    #   out_ref: (TT, B, H)        last-layer hidden for these timesteps
    #   h_sc/c_sc: (L, B, H) f32   state, persists across grid steps
    @pl.when(pl.program_id(0) == 0)
    def _():
        h_sc[...] = jnp.zeros_like(h_sc)
        c_sc[...] = jnp.zeros_like(c_sc)

    L, _, H = h_sc.shape
    TT = gx0_ref.shape[0]

    def cell(l, gates):
        i = jax.nn.sigmoid(gates[:, 0 * H:1 * H])
        f = jax.nn.sigmoid(gates[:, 1 * H:2 * H])
        g = jnp.tanh(gates[:, 2 * H:3 * H])
        o = jax.nn.sigmoid(gates[:, 3 * H:4 * H])
        c = f * c_sc[l] + i * g
        h = o * jnp.tanh(c)
        c_sc[l] = c
        h_sc[l] = h
        return h

    for tt in range(TT):          # TT is small & static: full unroll
        # Layer 0: x-side matmul was hoisted out of the recurrence (gx0).
        gates = (gx0_ref[tt]
                 + jnp.dot(h_sc[0].astype(w0_ref.dtype), w0_ref[...],
                           preferred_element_type=jnp.float32)
                 + b_ref[0])
        x = cell(0, gates)
        # Layers 1..L-1: single fused [x | h] @ (2H,4H) matmul per layer.
        for l in range(1, L):
            xh = jnp.concatenate([x, h_sc[l]], axis=-1).astype(w_ref.dtype)
            gates = (jnp.dot(xh, w_ref[l - 1],
                             preferred_element_type=jnp.float32) + b_ref[l])
            x = cell(l, gates)
        out_ref[tt] = x.astype(out_ref.dtype)


def residual_heads_kernel(xh_ref, h_ref, wres_ref, bres_ref,
                          whead_ref, bhead_ref, o_ref):
    # y = xh @ Wres + bres + lstm_out ; out = y @ [W_head_0 | ... | W_head_K-1]
    y = (jnp.dot(xh_ref[...], wres_ref[...],
                 preferred_element_type=jnp.float32)
         + bres_ref[...] + h_ref[...])
    o_ref[...] = (jnp.dot(y.astype(whead_ref.dtype), whead_ref[...],
                          preferred_element_type=jnp.float32)
                  + bhead_ref[...])


# ---------------------------------------------------------------------------
# Wrappers
# ---------------------------------------------------------------------------
def _row_tile(m):
    """Row tile: <=512 rows, 8-aligned, divides m, and gives >=2 grid steps
    whenever m permits (so 'parallel' grids use both v7x TCs and pipeline)."""
    if m <= 8:
        return m
    cap = max(8, min(512, (m // 2) // 8 * 8))
    for tm in range(cap, 7, -8):
        if m % tm == 0:
            return tm
    return m        # m not a multiple of 8: single full-extent block


def _time_chunk(t):
    """Timesteps per recurrent grid step (divides t)."""
    for tt in (8, 4, 2):
        if t % tt == 0:
            return tt
    return 1


def compression_and_gx0(x, wc, bc, w0_ih):
    """x:(M,Din) f32 -> (relu(x@Wc+bc) as bf16 (M,H), gx0=xh@W_ih_0^T f32 (M,4H))."""
    M, D_in = x.shape
    H = wc.shape[1]
    G = w0_ih.shape[1]
    tm = _row_tile(M)
    return pl.pallas_call(
        compression_gx0_kernel,
        out_shape=(jax.ShapeDtypeStruct((M, H), jnp.bfloat16),
                   jax.ShapeDtypeStruct((M, G), jnp.float32)),
        grid=(M // tm,),
        in_specs=[
            pl.BlockSpec((tm, D_in), lambda i: (i, 0)),
            pl.BlockSpec((D_in, H), lambda i: (0, 0)),
            pl.BlockSpec((1, H), lambda i: (0, 0)),
            pl.BlockSpec((H, G), lambda i: (0, 0)),
        ],
        out_specs=(pl.BlockSpec((tm, H), lambda i: (i, 0)),
                   pl.BlockSpec((tm, G), lambda i: (i, 0))),
        compiler_params=pltpu.CompilerParams(
            dimension_semantics=("parallel",)),
    )(x, wc, bc, w0_ih)


def lstm_stack(gx0, w0_hh, w_cat, bias):
    """Full multi-layer LSTM stack in one pallas_call, TT steps per grid step.

    gx0: (T,B,4H) f32; w0_hh: (H,4H) bf16; w_cat: (L-1,2H,4H) bf16;
    bias: (L,1,4H) f32.  Returns last-layer hidden sequence (T,B,H) f32.
    """
    T, B, G = gx0.shape
    H = G // 4
    Lm1 = w_cat.shape[0]
    L = Lm1 + 1
    TT = _time_chunk(T)

    # VMEM budget from actual need (default pipeliner double-buffers even
    # constant-index blocks), floored at the 32 MiB default scoped limit.
    need = (2 * (TT * B * G * 4 + TT * B * H * 4)                 # gx0 + out blocks
            + 2 * (H * G * 2 + Lm1 * 2 * H * G * 2 + L * G * 4)   # resident weights
            + 2 * L * B * H * 4)                                  # h/c scratch
    vmem_limit = int(max(need + need // 2, 32 * 1024 * 1024))

    return pl.pallas_call(
        lstm_stack_kernel,
        out_shape=jax.ShapeDtypeStruct((T, B, H), jnp.float32),
        grid=(T // TT,),
        in_specs=[
            pl.BlockSpec((TT, B, G), lambda t: (t, 0, 0)),
            pl.BlockSpec((H, G), lambda t: (0, 0)),
            pl.BlockSpec((Lm1, 2 * H, G), lambda t: (0, 0, 0)),
            pl.BlockSpec((L, 1, G), lambda t: (0, 0, 0)),
        ],
        out_specs=pl.BlockSpec((TT, B, H), lambda t: (t, 0, 0)),
        scratch_shapes=[
            pltpu.VMEM((L, B, H), jnp.float32),   # h state (all layers)
            pltpu.VMEM((L, B, H), jnp.float32),   # c state (all layers)
        ],
        compiler_params=pltpu.CompilerParams(
            dimension_semantics=("arbitrary",),   # serial recurrence over time
            vmem_limit_bytes=vmem_limit,
        ),
    )(gx0, w0_hh, w_cat, bias)


def residual_plus_heads(xh, h, wres, bres, whead, bhead):
    """Fused: (xh@Wres + bres + h) @ Whead_cat + bhead_cat -> (M, K*C)."""
    M, H = xh.shape
    N = whead.shape[1]
    tm = _row_tile(M)
    return pl.pallas_call(
        residual_heads_kernel,
        out_shape=jax.ShapeDtypeStruct((M, N), jnp.float32),
        grid=(M // tm,),
        in_specs=[
            pl.BlockSpec((tm, H), lambda i: (i, 0)),
            pl.BlockSpec((tm, H), lambda i: (i, 0)),
            pl.BlockSpec((H, H), lambda i: (0, 0)),
            pl.BlockSpec((1, H), lambda i: (0, 0)),
            pl.BlockSpec((H, N), lambda i: (0, 0)),
            pl.BlockSpec((1, N), lambda i: (0, 0)),
        ],
        out_specs=pl.BlockSpec((tm, N), lambda i: (i, 0)),
        compiler_params=pltpu.CompilerParams(
            dimension_semantics=("parallel",)),
    )(xh, h, wres, bres, whead, bhead)


# ---------------------------------------------------------------------------
# Model: parameters + forward
# ---------------------------------------------------------------------------
def init_params(key, input_dim, hidden_dim, num_classes, num_rnn_layers,
                num_heads):
    H = hidden_dim
    assert num_rnn_layers >= 2, "fused [x|h] layout expects >= 2 recurrent layers"

    def uniform(k, shape, fan_in):
        bound = 1.0 / jnp.sqrt(jnp.float32(fan_in))
        return jax.random.uniform(k, shape, jnp.float32, -bound, bound)

    keys = iter(jax.random.split(key, 4 + 4 * num_rnn_layers + 2 * num_heads))
    p = {}
    # compression_fc: Linear(input_dim -> hidden_dim)
    p["comp_w"] = uniform(next(keys), (input_dim, H), input_dim).astype(jnp.bfloat16)
    p["comp_b"] = uniform(next(keys), (1, H), input_dim)
    # residual_fc: Linear(hidden_dim -> hidden_dim)
    p["res_w"] = uniform(next(keys), (H, H), H).astype(jnp.bfloat16)
    p["res_b"] = uniform(next(keys), (1, H), H)

    # Recurrent stack (PyTorch LSTM parameter convention, stored transposed).
    # Layer 0: W_ih^T kept separate (its input matmul is hoisted out of the
    # recurrence); only W_hh^T stays resident in the recurrent kernel.
    w_ih0 = uniform(next(keys), (H, 4 * H), H)
    w_hh0 = uniform(next(keys), (H, 4 * H), H)
    b0 = uniform(next(keys), (4 * H,), H) + uniform(next(keys), (4 * H,), H)
    p["rnn_w0_ih"] = w_ih0.astype(jnp.bfloat16)                  # (H, 4H)
    p["rnn_w0_hh"] = w_hh0.astype(jnp.bfloat16)                  # (H, 4H)
    # Layers 1..L-1: fused [W_ih^T ; W_hh^T] -> one (2H,4H) matmul per layer.
    w_cat, biases = [], [b0.reshape(1, 4 * H)]
    for _ in range(num_rnn_layers - 1):
        w_ih = uniform(next(keys), (H, 4 * H), H)
        w_hh = uniform(next(keys), (H, 4 * H), H)
        w_cat.append(jnp.concatenate([w_ih, w_hh], axis=0))
        b = uniform(next(keys), (4 * H,), H) + uniform(next(keys), (4 * H,), H)
        biases.append(b.reshape(1, 4 * H))
    p["rnn_w"] = jnp.stack(w_cat).astype(jnp.bfloat16)           # (L-1, 2H, 4H)
    p["rnn_b"] = jnp.stack(biases)                               # (L, 1, 4H)

    # classifier heads: Linear(hidden_dim -> num_classes) per y_key,
    # concatenated along the output dim -> one lane-dense matmul.
    hw, hb = [], []
    for _ in range(num_heads):
        hw.append(uniform(next(keys), (H, num_classes), H))
        hb.append(uniform(next(keys), (num_classes,), H))
    p["head_w"] = jnp.concatenate(hw, axis=1).astype(jnp.bfloat16)   # (H, K*C)
    p["head_b"] = jnp.concatenate(hb).reshape(1, num_heads * num_classes)
    return p


def simple_lstm_classifier_forward(params, x, num_heads, *,
                                   keep_module_layout=True):
    """x: (B, T, input_dim) -> (num_heads, B, T, num_classes)."""
    B, T, D_in = x.shape
    H = params["comp_w"].shape[1]
    KC = params["head_w"].shape[1]
    C = KC // num_heads

    # Go time-major ONCE so the recurrent grid walks time with plain index_maps.
    x_tm = jnp.transpose(x, (1, 0, 2)).reshape(T * B, D_in)       # (T*B, D_in)

    # compression_fc + ReLU (bf16 xh) fused with the hoisted layer-0 matmul.
    xh, gx0 = compression_and_gx0(x_tm, params["comp_w"], params["comp_b"],
                                  params["rnn_w0_ih"])            # (T*B,H),(T*B,4H)

    # Fused 10-layer recurrent stack, TT timesteps per grid step.
    h = lstm_stack(gx0.reshape(T, B, 4 * H), params["rnn_w0_hh"],
                   params["rnn_w"], params["rnn_b"])              # (T, B, H)

    # fused: lstm_out + residual_fc(xh) -> all heads in one lane-dense matmul.
    out = residual_plus_heads(xh, h.reshape(T * B, H),
                              params["res_w"], params["res_b"],
                              params["head_w"], params["head_b"]) # (T*B, K*C)

    out = out.reshape(T, B, num_heads, C)
    if keep_module_layout:
        # Matches the PyTorch module output: (K, B, T, C).  Costs one HBM
        # round-trip of the output; layout-agnostic callers can pass
        # keep_module_layout=False and consume (T, B, K, C) directly.
        return jnp.transpose(out, (2, 1, 0, 3))
    return out


# ---------------------------------------------------------------------------
if __name__ == "__main__":
    # Small shapes consistent with the module (scaled-down dims, 6 heads,
    # 10-layer recurrent stack as in the module's __init__).
    B, T = 2, 8
    INPUT_DIM, HIDDEN_DIM, NUM_CLASSES = 128, 128, 128
    NUM_RNN_LAYERS = 10
    NUM_HEADS = 6  # len(y_keys)

    key = jax.random.PRNGKey(0)
    k_params, k_x = jax.random.split(key)
    params = init_params(k_params, INPUT_DIM, HIDDEN_DIM, NUM_CLASSES,
                         NUM_RNN_LAYERS, NUM_HEADS)
    x = jax.random.normal(k_x, (B, T, INPUT_DIM), jnp.float32)

    out = simple_lstm_classifier_forward(params, x, NUM_HEADS)
    out = jax.block_until_ready(out)
    assert out.shape == (NUM_HEADS, B, T, NUM_CLASSES), out.shape
    assert bool(jnp.all(jnp.isfinite(out)))
    print("KERNEL_OK")
</pallas_src>

<mosaic_0001>
module attributes {stable_mosaic.version = 11 : i64} {
  func.func @compression_gx0_kernel(%arg0: i32, %arg1: memref<8x128xf32, #tpu.memory_space<vmem>>, %arg2: memref<128x128xbf16, #tpu.memory_space<vmem>>, %arg3: memref<1x128xf32, #tpu.memory_space<vmem>>, %arg4: memref<128x512xbf16, #tpu.memory_space<vmem>>, %arg5: memref<8x128xbf16, #tpu.memory_space<vmem>>, %arg6: memref<8x512xf32, #tpu.memory_space<vmem>>) attributes {dimension_semantics = [#tpu.dimension_semantics<parallel>], iteration_bounds = array<i64: 2>, scalar_prefetch = 0 : i64, scratch_operands = 0 : i64, tpu.core_type = #tpu.core_type<tc>, window_params = [{transform_indices = @transform_0, window_bounds = array<i64: 8, 128>}, {pipeline_mode = #tpu.pipeline_mode<synchronous>, transform_indices = @transform_1, window_bounds = array<i64: 128, 128>}, {pipeline_mode = #tpu.pipeline_mode<synchronous>, transform_indices = @transform_2, window_bounds = array<i64: 1, 128>}, {pipeline_mode = #tpu.pipeline_mode<synchronous>, transform_indices = @transform_3, window_bounds = array<i64: 128, 512>}, {transform_indices = @transform_4, window_bounds = array<i64: 8, 128>}, {transform_indices = @transform_5, window_bounds = array<i64: 8, 512>}]} {
    %c0 = arith.constant 0 : index
    %c0_0 = arith.constant 0 : index
    %0 = vector.load %arg1[%c0, %c0_0] : memref<8x128xf32, #tpu.memory_space<vmem>>, vector<8x128xf32>
    %1 = arith.truncf %0 : vector<8x128xf32> to vector<8x128xbf16>
    %c0_1 = arith.constant 0 : index
    %c0_2 = arith.constant 0 : index
    %2 = vector.load %arg2[%c0_1, %c0_2] : memref<128x128xbf16, #tpu.memory_space<vmem>>, vector<128x128xbf16>
    %cst = arith.constant dense<0.000000e+00> : vector<8x128xf32>
    %3 = tpu.matmul %1, %2, %cst {dimension_numbers = #tpu.dot_dimension_numbers<[1], [0], [0], [1], [0, 0, 1, 1], [], []>} : vector<8x128xbf16>, vector<128x128xbf16>, vector<8x128xf32> -> vector<8x128xf32>
    %c0_3 = arith.constant 0 : index
    %c0_4 = arith.constant 0 : index
    %4 = vector.load %arg3[%c0_3, %c0_4] : memref<1x128xf32, #tpu.memory_space<vmem>>, vector<1x128xf32>
    %5 = vector.broadcast %4 : vector<1x128xf32> to vector<8x128xf32>
    %6 = arith.addf %3, %5 : vector<8x128xf32>
    %cst_5 = arith.constant 0.000000e+00 : f32
    %7 = vector.broadcast %cst_5 : f32 to vector<8x128xf32>
    %8 = arith.maximumf %6, %7 : vector<8x128xf32>
    %9 = arith.truncf %8 : vector<8x128xf32> to vector<8x128xbf16>
    %c0_6 = arith.constant 0 : index
    %c0_7 = arith.constant 0 : index
    %10 = vector.load %arg5[%c0_6, %c0_7] : memref<8x128xbf16, #tpu.memory_space<vmem>>, vector<8x128xbf16>
    tpu.vector_store %arg5[%c0_6, %c0_7], %9 {strides = array<i32>} : memref<8x128xbf16, #tpu.memory_space<vmem>>, vector<8x128xbf16>,
    %c0_8 = arith.constant 0 : index
    %c0_9 = arith.constant 0 : index
    %11 = vector.load %arg4[%c0_8, %c0_9] : memref<128x512xbf16, #tpu.memory_space<vmem>>, vector<128x512xbf16>
    %cst_10 = arith.constant dense<0.000000e+00> : vector<8x512xf32>
    %12 = tpu.matmul %9, %11, %cst_10 {dimension_numbers = #tpu.dot_dimension_numbers<[1], [0], [0], [1], [0, 0, 1, 1], [], []>} : vector<8x128xbf16>, vector<128x512xbf16>, vector<8x512xf32> -> vector<8x512xf32>
    %c0_11 = arith.constant 0 : index
    %c0_12 = arith.constant 0 : index
    %13 = vector.load %arg6[%c0_11, %c0_12] : memref<8x512xf32, #tpu.memory_space<vmem>>, vector<8x512xf32>
    tpu.vector_store %arg6[%c0_11, %c0_12], %12 {strides = array<i32>} : memref<8x512xf32, #tpu.memory_space<vmem>>, vector<8x512xf32>,
    return
  }
  func.func @transform_0(%arg0: i32) -> (i32, i32) {
    %c0_i32 = arith.constant 0 : i32
    %c0_i32_0 = arith.constant 0 : i32
    return %arg0, %c0_i32 : i32, i32
  }
  func.func @transform_1(%arg0: i32) -> (i32, i32) {
    %c0_i32 = arith.constant 0 : i32
    %c0_i32_0 = arith.constant 0 : i32
    %c0_i32_1 = arith.constant 0 : i32
    return %c0_i32, %c0_i32_0 : i32, i32
  }
  func.func @transform_2(%arg0: i32) -> (i32, i32) {
    %c0_i32 = arith.constant 0 : i32
    %c0_i32_0 = arith.constant 0 : i32
    %c0_i32_1 = arith.constant 0 : i32
    return %c0_i32, %c0_i32_0 : i32, i32
  }
  func.func @transform_3(%arg0: i32) -> (i32, i32) {
    %c0_i32 = arith.constant 0 : i32
    %c0_i32_0 = arith.constant 0 : i32
    %c0_i32_1 = arith.constant 0 : i32
    return %c0_i32, %c0_i32_0 : i32, i32
  }
  func.func @transform_4(%arg0: i32) -> (i32, i32) {
    %c0_i32 = arith.constant 0 : i32
    %c0_i32_0 = arith.constant 0 : i32
    return %arg0, %c0_i32 : i32, i32
  }
  func.func @transform_5(%arg0: i32) -> (i32, i32) {
    %c0_i32 = arith.constant 0 : i32
    %c0_i32_0 = arith.constant 0 : i32
    return %arg0, %c0_i32 : i32, i32
  }
}

</mosaic_0001>

<llo_original>
// kernel: tpu_custom_call.1
$region0: #{tpu_custom_call.1}
  #allocation0 [shape = 'u32[]', space=smem, size = 0x4, offset = 0x4, fixed_abs, tag = 'smem constant byte address 0x4 - core index']
  #allocation1 [shape = 'u32[144,128]{1,0:T(1,128)}', space=vmem, size = 0x12000, scoped, tag = 'internal scratch']
  %s0 = inlined_call_operand.hbm [shape: f32[16,128], index: 0, kind: input, shape index: {}]
  %s1 = inlined_call_operand.hbm [shape: bf16[128,128], index: 1, kind: input, shape index: {}]
  %s2 = inlined_call_operand.vmem [shape: f32[1,128], index: 2, kind: input, shape index: {}]
  %s3 = inlined_call_operand.hbm [shape: bf16[128,512], index: 3, kind: input, shape index: {}]
  %s4 = inlined_call_operand.hbm [shape: bf16[16,128], index: 4, kind: output, shape index: {0}]
  %s5 = inlined_call_operand.hbm [shape: f32[16,512], index: 5, kind: output, shape index: {1}]
  %6 = xla_tuple %s4, %s5
  %s7 = sld [smem:[#allocation0]]
  $region69: #{tpu_custom_call.1} parent=0
    _
  %s9 = ssub.s32 1, %s7
  %s10 = scalar_select 0, %s9, %s7
  $region1: #{tpu_custom_call.1} parent=0
    #allocation2 [shape = 'u8[8192]{0}', space=vmem, size = 0x2000, scoped, tag = 'input window, operand 0']
    #allocation3 [shape = 's32[2]{0}', space=sflag, size = 0x8, scoped, tag = 'scoped memory for tpu_custom_call.1']
    #allocation4 [shape = 's32[2]{0}', space=sflag, size = 0x8, scoped, tag = 'scoped memory for tpu_custom_call.1']
    #allocation5 [shape = 'u8[32768]{0}', space=vmem, size = 0x8000, scoped, tag = 'input window, operand 1, single buffered']
    #allocation6 [shape = 's32[1]{0}', space=sflag, size = 0x4, scoped, tag = 'scoped memory for tpu_custom_call.1']
    #allocation7 [shape = 'u8[131072]{0}', space=vmem, size = 0x20000, scoped, tag = 'input window, operand 3, single buffered']
    #allocation8 [shape = 'u8[4096]{0}', space=vmem, size = 0x1000, scoped, tag = 'output window, operand 0']
    #allocation9 [shape = 'u8[32768]{0}', space=vmem, size = 0x8000, scoped, tag = 'output window, operand 1']
    #allocation10 [shape = 's32[2]{0}', space=sflag, size = 0x8, scoped, tag = 'scoped memory for tpu_custom_call.1']
    %11 = vsyncpa [#allocation3], 0
    %s12 = scalar_lea.sflag [#allocation3], 1
    %13 = vsyncpa %s12, 0
    %14 = vsyncpa [#allocation6], 0
    %15 = vsyncpa [#allocation4], 0
    %s16 = scalar_lea.sflag [#allocation4], 1
    %17 = vsyncpa %s16, 0
    %18 = vsyncpa [#allocation10], 0
    %s19 = scalar_lea.sflag [#allocation10], 1
    %20 = vsyncpa %s19, 0
    loop: start=0, step=1, limit=4
    $region2: #{tpu_custom_call.1} parent=1 // loop_pre_header
      _
    $region3: #{tpu_custom_call.1} parent=1 // loop_header
      %s22 = sphi 0, %s26
      %p23 = scmp.ge.s32.totalorder %s22, 4
      %s32 = sphi 0, %s34
      %s35 = sphi 0, %s32
      %s36 = sphi 0, %s35
      %s52 = sphi 0, %s36
      %s56 = sphi 0, %s56
      %s58 = sphi 0, %s56
      %s59 = sphi 0, %s58
      %s73 = sphi 0, %s59
      %s77 = sphi 0, %s77
      %s79 = sphi 0, %s77
      %s80 = sphi 0, %s79
      %s94 = sphi 0, %s80
      %s98 = sphi 0, %s98
      %s100 = sphi 0, %s98
      %s101 = sphi 0, %s100
      %s115 = sphi 0, %s101
      %s121 = sphi 0, %s123
      %s124 = sphi 0, %s121
      %s125 = sphi 0, %s124
      %s141 = sphi 0, %s125
      %s147 = sphi 0, %s149
      %s150 = sphi 0, %s147
      %s151 = sphi 0, %s150
      %s167 = sphi 0, %s151
    $region4: #{tpu_custom_call.1} parent=1 // loop_header_branch
      %25 = sbr.rel (%p23) target = $region8
    $region5: #{tpu_custom_call.1} parent=1 // loop_body
      %s27 = ssub.s32 %s22, 1
      %s28 = ssub.s32 %s22, 2
      %s29 = sadd.s32 %s22, 1
      %s30 = ssub.s32 %s22, %s29
      %p31 = scmp.eq.s32.totalorder %s30, 0
      %s33 = sadd.s32 %s32, 1
      %s34 = scalar_select %p31, %s32, %s33
      %p37 = pneg %p31
      %p38 = scmp.eq.s32.totalorder %s22, 1
      %p39 = por %p37, %p38
      %p40 = scmp.ne.s32.totalorder %s32, %s35
      %p41 = scmp.eq.s32.totalorder %s22, 0
      %p42 = por %p40, %p41
      %p43 = scmp.ne.s32.totalorder %s32, %s35
      %p44 = scmp.eq.s32.totalorder %s27, 1
      %p45 = por %p43, %p44
      %p46 = scmp.ne.s32.totalorder %s35, %s36
      %p47 = scmp.eq.s32.totalorder %s27, 0
      %p48 = por %p46, %p47
      %p49 = scmp.ne.s32.totalorder %s35, %s36
      %p50 = scmp.eq.s32.totalorder %s28, 1
      %p51 = por %p49, %p50
      %p53 = scmp.ne.s32.totalorder %s36, %s52
      %p54 = scmp.eq.s32.totalorder %s28, 0
      %p55 = por %p53, %p54
      %s57 = sadd.s32 %s56, 1
      %p60 = scmp.eq.s32.totalorder %s22, 1
      %p61 = scmp.ne.s32.totalorder %s56, %s58
      %p62 = scmp.eq.s32.totalorder %s22, 0
      %p63 = por %p61, %p62
      %p64 = scmp.ne.s32.totalorder %s56, %s58
      %p65 = scmp.eq.s32.totalorder %s27, 1
      %p66 = por %p64, %p65
      %p67 = scmp.ne.s32.totalorder %s58, %s59
      %p68 = scmp.eq.s32.totalorder %s27, 0
      %p69 = por %p67, %p68
      %p70 = scmp.ne.s32.totalorder %s58, %s59
      %p71 = scmp.eq.s32.totalorder %s28, 1
      %p72 = por %p70, %p71
      %p74 = scmp.ne.s32.totalorder %s59, %s73
      %p75 = scmp.eq.s32.totalorder %s28, 0
      %p76 = por %p74, %p75
      %s78 = sadd.s32 %s77, 1
      %p81 = scmp.eq.s32.totalorder %s22, 1
      %p82 = scmp.ne.s32.totalorder %s77, %s79
      %p83 = scmp.eq.s32.totalorder %s22, 0
      %p84 = por %p82, %p83
      %p85 = scmp.ne.s32.totalorder %s77, %s79
      %p86 = scmp.eq.s32.totalorder %s27, 1
      %p87 = por %p85, %p86
      %p88 = scmp.ne.s32.totalorder %s79, %s80
      %p89 = scmp.eq.s32.totalorder %s27, 0
      %p90 = por %p88, %p89
      %p91 = scmp.ne.s32.totalorder %s79, %s80
      %p92 = scmp.eq.s32.totalorder %s28, 1
      %p93 = por %p91, %p92
      %p95 = scmp.ne.s32.totalorder %s80, %s94
      %p96 = scmp.eq.s32.totalorder %s28, 0
      %p97 = por %p95, %p96
      %s99 = sadd.s32 %s98, 1
      %p102 = scmp.eq.s32.totalorder %s22, 1
      %p103 = scmp.ne.s32.totalorder %s98, %s100
      %p104 = scmp.eq.s32.totalorder %s22, 0
      %p105 = por %p103, %p104
      %p106 = scmp.ne.s32.totalorder %s98, %s100
      %p107 = scmp.eq.s32.totalorder %s27, 1
      %p108 = por %p106, %p107
      %p109 = scmp.ne.s32.totalorder %s100, %s101
      %p110 = scmp.eq.s32.totalorder %s27, 0
      %p111 = por %p109, %p110
      %p112 = scmp.ne.s32.totalorder %s100, %s101
      %p113 = scmp.eq.s32.totalorder %s28, 1
      %p114 = por %p112, %p113
      %p116 = scmp.ne.s32.totalorder %s101, %s115
      %p117 = scmp.eq.s32.totalorder %s28, 0
      %p118 = por %p116, %p117
      %s119 = ssub.s32 %s22, %s29
      %p120 = scmp.eq.s32.totalorder %s119, 0
      %s122 = sadd.s32 %s121, 1
      %s123 = scalar_select %p120, %s121, %s122
      %p126 = pneg %p120
      %p127 = scmp.eq.s32.totalorder %s22, 1
      %p128 = por %p126, %p127
      %p129 = scmp.ne.s32.totalorder %s121, %s124
      %p130 = scmp.eq.s32.totalorder %s22, 0
      %p131 = por %p129, %p130
      %p132 = scmp.ne.s32.totalorder %s121, %s124
      %p133 = scmp.eq.s32.totalorder %s27, 1
      %p134 = por %p132, %p133
      %p135 = scmp.ne.s32.totalorder %s124, %s125
      %p136 = scmp.eq.s32.totalorder %s27, 0
      %p137 = por %p135, %p136
      %p138 = scmp.ne.s32.totalorder %s124, %s125
      %p139 = scmp.eq.s32.totalorder %s28, 1
      %p140 = por %p138, %p139
      %p142 = scmp.ne.s32.totalorder %s125, %s141
      %p143 = scmp.eq.s32.totalorder %s28, 0
      %p144 = por %p142, %p143
      %s145 = ssub.s32 %s22, %s29
      %p146 = scmp.eq.s32.totalorder %s145, 0
      %s148 = sadd.s32 %s147, 1
      %s149 = scalar_select %p146, %s147, %s148
      %p152 = pneg %p146
      %p153 = scmp.eq.s32.totalorder %s22, 1
      %p154 = por %p152, %p153
      %p155 = scmp.ne.s32.totalorder %s147, %s150
      %p156 = scmp.eq.s32.totalorder %s22, 0
      %p157 = por %p155, %p156
      %p158 = scmp.ne.s32.totalorder %s147, %s150
      %p159 = scmp.eq.s32.totalorder %s27, 1
      %p160 = por %p158, %p159
      %p161 = scmp.ne.s32.totalorder %s150, %s151
      %p162 = scmp.eq.s32.totalorder %s27, 0
      %p163 = por %p161, %p162
      %p164 = scmp.ne.s32.totalorder %s150, %s151
      %p165 = scmp.eq.s32.totalorder %s28, 1
      %p166 = por %p164, %p165
      %p168 = scmp.ne.s32.totalorder %s151, %s167
      %p169 = scmp.eq.s32.totalorder %s28, 0
      %p170 = por %p168, %p169
      %p171 = scmp.le.s32.totalorder 1, %s22
      %p172 = scmp.lt.s32.totalorder %s22, 3
      %p173 = pnand %p171, %p172
      %p174 = pneg %p173
      // Predicated region
      $region9: #{tpu_custom_call.1} parent=5 // pred_check
        _
      $region10: #{tpu_custom_call.1} parent=5 // pred_check_branch
        %176 = sbr.rel (%p173) target = $region12
      $region11: #{tpu_custom_call.1} parent=5 // pred_region
        %s177 = ssub.s32 %s22, 1
        // Predicated region
        $region13: #{tpu_custom_call.1} parent=11 // pred_check
          %p178 = pneg %p69
        $region14: #{tpu_custom_call.1} parent=11 // pred_check_branch
          %180 = sbr.rel (%p178) target = $region16
        $region15: #{tpu_custom_call.1} parent=11 // pred_region
          %s182 = ssub.s32 1024, 1024
          %183 = vsyncadd [#allocation6], %s182
          %s184 = sshll.u32 [#allocation5], 4
          %s185 = int_to_ptr.vmem [resolvable:$true] %s184
          %190 = dma.hbm_to_vmem [thread:$0]  %s1, 1024, %s185, [#allocation6], 64, 64, 4
        $region16: #{tpu_custom_call.1} parent=11 // pred_fallthru
          _
        // Predicated region
        $region17: #{tpu_custom_call.1} parent=11 // pred_check
          %p191 = pneg %p90
        $region18: #{tpu_custom_call.1} parent=11 // pred_check_branch
          %193 = sbr.rel (%p191) target = $region20
        $region19: #{tpu_custom_call.1} parent=11 // pred_region
          _
        $region20: #{tpu_custom_call.1} parent=11 // pred_fallthru
          _
        // Predicated region
        $region21: #{tpu_custom_call.1} parent=11 // pred_check
          %p194 = pneg %p111
        $region22: #{tpu_custom_call.1} parent=11 // pred_check_branch
          %196 = sbr.rel (%p194) target = $region24
        $region23: #{tpu_custom_call.1} parent=11 // pred_region
          %s198 = ssub.s32 4096, 4096
          %199 = vsyncadd [#allocation6], %s198
          %s200 = sshll.u32 [#allocation7], 4
          %s201 = int_to_ptr.vmem [resolvable:$true] %s200
          %206 = dma.hbm_to_vmem [thread:$0]  %s3, 4096, %s201, [#allocation6], 256, 256, 16
        $region24: #{tpu_custom_call.1} parent=11 // pred_fallthru
          _
      $region12: #{tpu_custom_call.1} parent=5 // pred_fallthru
        _
      %p207 = scmp.lt.s32.totalorder %s22, 2
      // Predicated region
      $region25: #{tpu_custom_call.1} parent=5 // pred_check
        %p208 = pneg %p207
      $region26: #{tpu_custom_call.1} parent=5 // pred_check_branch
        %210 = sbr.rel (%p208) target = $region28
      $region27: #{tpu_custom_call.1} parent=5 // pred_region
        // Predicated region
        $region29: #{tpu_custom_call.1} parent=27 // pred_check
          %p211 = pneg %p42
        $region30: #{tpu_custom_call.1} parent=27 // pred_check_branch
          %213 = sbr.rel (%p211) target = $region32
        $region31: #{tpu_custom_call.1} parent=27 // pred_region
          %s214 = sand.u32 %s32, 1
          %s215 = scalar_lea.sflag [#allocation3], %s214
          %s216 = sand.u32 %s32, 1
          %s217 = smul.addr %s216, 8
          %s218 = scalar_lea.vmem [#allocation2], %s217
          %s220 = ssub.s32 128, 128
          %221 = vsyncadd %s215, %s220
          %s222 = smul.addr %s22, 128
          %s223 = scalar_lea.hbm %s0, %s222
          %s225 = sshll.u32 %s218, 4
          %s226 = int_to_ptr.vmem [resolvable:$true] %s225
          %228 = dma.hbm_to_vmem [thread:$0]  %s223, 128, %s226, %s215
        $region32: #{tpu_custom_call.1} parent=27 // pred_fallthru
          _
      $region28: #{tpu_custom_call.1} parent=5 // pred_fallthru
        _
      %p229 = scmp.le.s32.totalorder 1, %s22
      %p230 = scmp.lt.s32.totalorder %s22, 3
      %p231 = pnand %p229, %p230
      %p232 = pneg %p231
      // Predicated region
      $region33: #{tpu_custom_call.1} parent=5 // pred_check
        _
      $region34: #{tpu_custom_call.1} parent=5 // pred_check_branch
        %234 = sbr.rel (%p231) target = $region36
      $region35: #{tpu_custom_call.1} parent=5 // pred_region
        %s235 = ssub.s32 %s22, 1
        %s236 = sand.u32 %s35, 1
        %s237 = scalar_lea.sflag [#allocation3], %s236
        %s238 = sand.u32 %s35, 1
        %s239 = smul.addr %s238, 8
        %s240 = scalar_lea.vmem [#allocation2], %s239
        // Predicated region
        $region37: #{tpu_custom_call.1} parent=35 // pred_check
          %p241 = pneg %p48
        $region38: #{tpu_custom_call.1} parent=35 // pred_check_branch
          %243 = sbr.rel (%p241) target = $region40
        $region39: #{tpu_custom_call.1} parent=35 // pred_region
          %244 = dma.done %s237, 128
        $region40: #{tpu_custom_call.1} parent=35 // pred_fallthru
          _
        // Predicated region
        $region41: #{tpu_custom_call.1} parent=35 // pred_check
          %p245 = pneg %p69
        $region42: #{tpu_custom_call.1} parent=35 // pred_check_branch
          %247 = sbr.rel (%p245) target = $region44
        $region43: #{tpu_custom_call.1} parent=35 // pred_region
          %248 = dma.done [#allocation6], 1024
        $region44: #{tpu_custom_call.1} parent=35 // pred_fallthru
          _
        // Predicated region
        $region45: #{tpu_custom_call.1} parent=35 // pred_check
          %p249 = pneg %p111
        $region46: #{tpu_custom_call.1} parent=35 // pred_check_branch
          %251 = sbr.rel (%p249) target = $region48
        $region47: #{tpu_custom_call.1} parent=35 // pred_region
          %252 = dma.done [#allocation6], 4096
        $region48: #{tpu_custom_call.1} parent=35 // pred_fallthru
          _
        %s253 = sand.u32 %s35, 1
        %s254 = scalar_lea.sflag [#allocation3], %s253
        %s255 = sand.u32 %s35, 1
        %s256 = smul.addr %s255, 8
        %s257 = scalar_lea.vmem [#allocation2], %s256
        %p258 = pneg %p48
        %p259 = pneg %p45
        %p260 = pneg %p69
        %p261 = pneg %p66
        %p262 = pneg %p90
        %p263 = pneg %p87
        %p264 = pneg %p111
        %p265 = pneg %p108
        %p266 = pneg %p137
        %p267 = pneg %p134
        %s268 = sand.u32 %s124, 1
        %s269 = scalar_lea.sflag [#allocation4], %s268
        %s270 = sand.u32 %s124, 1
        %s271 = smul.addr %s270, 4
        %s272 = scalar_lea.vmem [#allocation8], %s271
        %p273 = pneg %p163
        %p274 = pneg %p160
        %s275 = sand.u32 %s150, 1
        %s276 = scalar_lea.sflag [#allocation10], %s275
        %s277 = sand.u32 %s150, 1
        %s278 = smul.addr %s277, 32
        %s279 = scalar_lea.vmem [#allocation9], %s278
        %v281 = vld [vmem:[%s240] sm:$0xff]
        %v282 = vpack.c.bf16 %v281, %v281
        %v283 = vld [vmem:[#allocation5] sm:$0xf]
        %v284 = vld [vmem:[#allocation5 + $0x4] sm:$0xf]
        %v285 = vld [vmem:[#allocation5 + $0x8] sm:$0xf]
        %v286 = vld [vmem:[#allocation5 + $0xc] sm:$0xf]
        %v287 = vld [vmem:[#allocation5 + $0x10] sm:$0xf]
        %v288 = vld [vmem:[#allocation5 + $0x14] sm:$0xf]
        %v289 = vld [vmem:[#allocation5 + $0x18] sm:$0xf]
        %v290 = vld [vmem:[#allocation5 + $0x1c] sm:$0xf]
        %v291 = vld [vmem:[#allocation5 + $0x20] sm:$0xf]
        %v292 = vld [vmem:[#allocation5 + $0x24] sm:$0xf]
        %v293 = vld [vmem:[#allocation5 + $0x28] sm:$0xf]
        %v294 = vld [vmem:[#allocation5 + $0x2c] sm:$0xf]
        %v295 = vld [vmem:[#allocation5 + $0x30] sm:$0xf]
        %v296 = vld [vmem:[#allocation5 + $0x34] sm:$0xf]
        %v297 = vld [vmem:[#allocation5 + $0x38] sm:$0xf]
        %v298 = vld [vmem:[#allocation5 + $0x3c] sm:$0xf]
        %v299 = vld [vmem:[%s2] sm:$0x1]
        %v301 = vlaneseq
        %v302 = vshrl.u32 %v301, 7
        %v303 = vsub.s32 0, %v302
        %v304 = vrot.slane %v299, %v303
        %v322 = vunpack.c.l.b16 %v283
        %v323 = vunpack.c.l.b16 %v284
        %v324 = vunpack.c.l.b16 %v285
        %v325 = vunpack.c.l.b16 %v286
        %v326 = vunpack.c.l.b16 %v287
        %v327 = vunpack.c.l.b16 %v288
        %v328 = vunpack.c.l.b16 %v289
        %v329 = vunpack.c.l.b16 %v290
        %v330 = vunpack.c.l.b16 %v291
        %v331 = vunpack.c.l.b16 %v292
        %v332 = vunpack.c.l.b16 %v293
        %v333 = vunpack.c.l.b16 %v294
        %v334 = vunpack.c.l.b16 %v295
        %v335 = vunpack.c.l.b16 %v296
        %v336 = vunpack.c.l.b16 %v297
        %v337 = vunpack.c.l.b16 %v298
        %v338 = vpack.c.b16 %v323, %v322
        %v339 = vpack.c.b16 %v325, %v324
        %v340 = vpack.c.b16 %v327, %v326
        %v341 = vpack.c.b16 %v329, %v328
        %v342 = vpack.c.b16 %v331, %v330
        %v343 = vpack.c.b16 %v333, %v332
        %v344 = vpack.c.b16 %v335, %v334
        %v345 = vpack.c.b16 %v337, %v336
        %354 = vmatprep.subr.bf16.mxu0 0
        %355 = vmatpush1.bf16.msra.mxu0 %v338
        %356 = vmatprep.subr.bf16.mxu0 0
        %357 = vmatpush1.bf16.msra.mxu0 %v339
        %358 = vmatprep.subr.bf16.mxu0 0
        %359 = vmatpush1.bf16.msra.mxu0 %v340
        %360 = vmatprep.subr.bf16.mxu0 0
        %361 = vmatpush1.bf16.msra.mxu0 %v341
        %362 = vmatprep.subr.bf16.mxu0 0
        %363 = vmatpush1.bf16.msra.mxu0 %v342
        %364 = vmatprep.subr.bf16.mxu0 0
        %365 = vmatpush1.bf16.msra.mxu0 %v343
        %366 = vmatprep.subr.bf16.mxu0 0
        %367 = vmatpush1.bf16.msra.mxu0 %v344
        %368 = vmatprep.subr.bf16.mxu0 0
        %369 = vmatpush1.bf16.msra.mxu0 %v345
        %370 = vmatprep.subr.bf16.mxu0 0
        %371 = vmatpush1.bf16.msra.mxu0 0
        %372 = vmatprep.subr.bf16.mxu0 0
        %373 = vmatpush1.bf16.msra.mxu0 0
        %374 = vmatprep.subr.bf16.mxu0 0
        %375 = vmatpush1.bf16.msra.mxu0 0
        %376 = vmatprep.subr.bf16.mxu0 0
        %377 = vmatpush1.bf16.msra.mxu0 0
        %378 = vmatprep.subr.bf16.mxu0 0
        %379 = vmatpush1.bf16.msra.mxu0 0
        %380 = vmatprep.subr.bf16.mxu0 0
        %381 = vmatpush1.bf16.msra.mxu0 0
        %382 = vmatprep.subr.bf16.mxu0 0
        %383 = vmatpush1.bf16.msra.mxu0 0
        %384 = vmatprep.subr.bf16.mxu0 0
        %385 = vmatpush1.bf16.msra.mxu0 0
        %386 = vmatprep.mubr.bf16.mxu0 0
        %387 = vmatmul.mubr.bf16.gmra.mrb[0].mxu0 %v282
        %v388 = vpop.f32.mrb[0].mxu0
        %v389 = vadd.f32 %v304, %v388
        %v390 = vpop.f32.mrb[0].mxu0
        %v391 = vpop.f32.mrb[0].mxu0
        %v392 = vpop.f32.mrb[0].mxu0
        %393 = vdwg.mxu0
        %v394 = vmax.f32 %v389, 0.0
        %v395 = vpack.c.bf16 %v394, %v394
        %396 = vst [vmem:[%s272] sm:$0xf] %v395
        %v397 = vld [vmem:[#allocation7] sm:$0xff]
        %v398 = vld [vmem:[#allocation7 + $0x8] sm:$0xff]
        %v399 = vld [vmem:[#allocation7 + $0x10] sm:$0xff]
        %v400 = vld [vmem:[#allocation7 + $0x18] sm:$0xff]
        %v401 = vld [vmem:[#allocation7 + $0x20] sm:$0xff]
        %v402 = vld [vmem:[#allocation7 + $0x28] sm:$0xff]
        %v403 = vld [vmem:[#allocation7 + $0x30] sm:$0xff]
        %v404 = vld [vmem:[#allocation7 + $0x38] sm:$0xff]
        %v405 = vld [vmem:[#allocation7 + $0x40] sm:$0xff]
        %v406 = vld [vmem:[#allocation7 + $0x48] sm:$0xff]
        %v407 = vld [vmem:[#allocation7 + $0x50] sm:$0xff]
        %v408 = vld [vmem:[#allocation7 + $0x58] sm:$0xff]
        %v409 = vld [vmem:[#allocation7 + $0x60] sm:$0xff]
        %v410 = vld [vmem:[#allocation7 + $0x68] sm:$0xff]
        %v411 = vld [vmem:[#allocation7 + $0x70] sm:$0xff]
        %v412 = vld [vmem:[#allocation7 + $0x78] sm:$0xff]
        %v413 = vld [vmem:[#allocation7 + $0x80] sm:$0xff]
        %v414 = vld [vmem:[#allocation7 + $0x88] sm:$0xff]
        %v415 = vld [vmem:[#allocation7 + $0x90] sm:$0xff]
        %v416 = vld [vmem:[#allocation7 + $0x98] sm:$0xff]
        %v417 = vld [vmem:[#allocation7 + $0xa0] sm:$0xff]
        %v418 = vld [vmem:[#allocation7 + $0xa8] sm:$0xff]
        %v419 = vld [vmem:[#allocation7 + $0xb0] sm:$0xff]
        %v420 = vld [vmem:[#allocation7 + $0xb8] sm:$0xff]
        %v421 = vld [vmem:[#allocation7 + $0xc0] sm:$0xff]
        %v422 = vld [vmem:[#allocation7 + $0xc8] sm:$0xff]
        %v423 = vld [vmem:[#allocation7 + $0xd0] sm:$0xff]
        %v424 = vld [vmem:[#allocation7 + $0xd8] sm:$0xff]
        %v425 = vld [vmem:[#allocation7 + $0xe0] sm:$0xff]
        %v426 = vld [vmem:[#allocation7 + $0xe8] sm:$0xff]
        %v427 = vld [vmem:[#allocation7 + $0xf0] sm:$0xff]
        %v428 = vld [vmem:[#allocation7 + $0xf8] sm:$0xff]
        %v461 = vunpack.c.l.b16 %v397
        %v462 = vunpack.c.h.b16 %v397
        %v463 = vunpack.c.l.b16 %v398
        %v464 = vunpack.c.h.b16 %v398
        %v465 = vunpack.c.l.b16 %v399
        %v466 = vunpack.c.h.b16 %v399
        %v467 = vunpack.c.l.b16 %v400
        %v468 = vunpack.c.h.b16 %v400
        %v469 = vunpack.c.l.b16 %v401
        %v470 = vunpack.c.h.b16 %v401
        %v471 = vunpack.c.l.b16 %v402
        %v472 = vunpack.c.h.b16 %v402
        %v473 = vunpack.c.l.b16 %v403
        %v474 = vunpack.c.h.b16 %v403
        %v475 = vunpack.c.l.b16 %v404
        %v476 = vunpack.c.h.b16 %v404
        %v477 = vunpack.c.l.b16 %v405
        %v478 = vunpack.c.h.b16 %v405
        %v479 = vunpack.c.l.b16 %v406
        %v480 = vunpack.c.h.b16 %v406
        %v481 = vunpack.c.l.b16 %v407
        %v482 = vunpack.c.h.b16 %v407
        %v483 = vunpack.c.l.b16 %v408
        %v484 = vunpack.c.h.b16 %v408
        %v485 = vunpack.c.l.b16 %v409
        %v486 = vunpack.c.h.b16 %v409
        %v487 = vunpack.c.l.b16 %v410
        %v488 = vunpack.c.h.b16 %v410
        %v489 = vunpack.c.l.b16 %v411
        %v490 = vunpack.c.h.b16 %v411
        %v491 = vunpack.c.l.b16 %v412
        %v492 = vunpack.c.h.b16 %v412
        %v493 = vunpack.c.l.b16 %v413
        %v494 = vunpack.c.h.b16 %v413
        %v495 = vunpack.c.l.b16 %v414
        %v496 = vunpack.c.h.b16 %v414
        %v497 = vunpack.c.l.b16 %v415
        %v498 = vunpack.c.h.b16 %v415
        %v499 = vunpack.c.l.b16 %v416
        %v500 = vunpack.c.h.b16 %v416
        %v501 = vunpack.c.l.b16 %v417
        %v502 = vunpack.c.h.b16 %v417
        %v503 = vunpack.c.l.b16 %v418
        %v504 = vunpack.c.h.b16 %v418
        %v505 = vunpack.c.l.b16 %v419
        %v506 = vunpack.c.h.b16 %v419
        %v507 = vunpack.c.l.b16 %v420
        %v508 = vunpack.c.h.b16 %v420
        %v509 = vunpack.c.l.b16 %v421
        %v510 = vunpack.c.h.b16 %v421
        %v511 = vunpack.c.l.b16 %v422
        %v512 = vunpack.c.h.b16 %v422
        %v513 = vunpack.c.l.b16 %v423
        %v514 = vunpack.c.h.b16 %v423
        %v515 = vunpack.c.l.b16 %v424
        %v516 = vunpack.c.h.b16 %v424
        %v517 = vunpack.c.l.b16 %v425
        %v518 = vunpack.c.h.b16 %v425
        %v519 = vunpack.c.l.b16 %v426
        %v520 = vunpack.c.h.b16 %v426
        %v521 = vunpack.c.l.b16 %v427
        %v522 = vunpack.c.h.b16 %v427
        %v523 = vunpack.c.l.b16 %v428
        %v524 = vunpack.c.h.b16 %v428
        %v525 = vpack.c.b16 %v465, %v461
        %v526 = vpack.c.b16 %v466, %v462
        %v527 = vpack.c.b16 %v467, %v463
        %v528 = vpack.c.b16 %v468, %v464
        %v529 = vpack.c.b16 %v473, %v469
        %v530 = vpack.c.b16 %v474, %v470
        %v531 = vpack.c.b16 %v475, %v471
        %v532 = vpack.c.b16 %v476, %v472
        %v533 = vpack.c.b16 %v481, %v477
        %v534 = vpack.c.b16 %v482, %v478
        %v535 = vpack.c.b16 %v483, %v479
        %v536 = vpack.c.b16 %v484, %v480
        %v537 = vpack.c.b16 %v489, %v485
        %v538 = vpack.c.b16 %v490, %v486
        %v539 = vpack.c.b16 %v491, %v487
        %v540 = vpack.c.b16 %v492, %v488
        %v541 = vpack.c.b16 %v497, %v493
        %v542 = vpack.c.b16 %v498, %v494
        %v543 = vpack.c.b16 %v499, %v495
        %v544 = vpack.c.b16 %v500, %v496
        %v545 = vpack.c.b16 %v505, %v501
        %v546 = vpack.c.b16 %v506, %v502
        %v547 = vpack.c.b16 %v507, %v503
        %v548 = vpack.c.b16 %v508, %v504
        %v549 = vpack.c.b16 %v513, %v509
        %v550 = vpack.c.b16 %v514, %v510
        %v551 = vpack.c.b16 %v515, %v511
        %v552 = vpack.c.b16 %v516, %v512
        %v553 = vpack.c.b16 %v521, %v517
        %v554 = vpack.c.b16 %v522, %v518
        %v555 = vpack.c.b16 %v523, %v519
        %v556 = vpack.c.b16 %v524, %v520
        %589 = vmatprep.subr.bf16.mxu0 %v526
        %590 = vmatpush1.bf16.msra.mxu0 %v525
        %591 = vmatprep.subr.bf16.mxu0 %v530
        %592 = vmatpush1.bf16.msra.mxu0 %v529
        %593 = vmatprep.subr.bf16.mxu0 %v534
        %594 = vmatpush1.bf16.msra.mxu0 %v533
        %595 = vmatprep.subr.bf16.mxu0 %v538
        %596 = vmatpush1.bf16.msra.mxu0 %v537
        %597 = vmatprep.subr.bf16.mxu0 %v542
        %598 = vmatpush1.bf16.msra.mxu0 %v541
        %599 = vmatprep.subr.bf16.mxu0 %v546
        %600 = vmatpush1.bf16.msra.mxu0 %v545
        %601 = vmatprep.subr.bf16.mxu0 %v550
        %602 = vmatpush1.bf16.msra.mxu0 %v549
        %603 = vmatprep.subr.bf16.mxu0 %v554
        %604 = vmatpush1.bf16.msra.mxu0 %v553
        %605 = vmatprep.subr.bf16.mxu0 0
        %606 = vmatpush1.bf16.msra.mxu0 0
        %607 = vmatprep.subr.bf16.mxu0 0
        %608 = vmatpush1.bf16.msra.mxu0 0
        %609 = vmatprep.subr.bf16.mxu0 0
        %610 = vmatpush1.bf16.msra.mxu0 0
        %611 = vmatprep.subr.bf16.mxu0 0
        %612 = vmatpush1.bf16.msra.mxu0 0
        %613 = vmatprep.subr.bf16.mxu0 0
        %614 = vmatpush1.bf16.msra.mxu0 0
        %615 = vmatprep.subr.bf16.mxu0 0
        %616 = vmatpush1.bf16.msra.mxu0 0
        %617 = vmatprep.subr.bf16.mxu0 0
        %618 = vmatpush1.bf16.msra.mxu0 0
        %619 = vmatprep.subr.bf16.mxu0 0
        %620 = vmatpush1.bf16.msra.mxu0 0
        %621 = vmatprep.mubr.bf16.mxu0 0
        %622 = vmatmul.mubr.bf16.gmra.mrb[0].mxu0 %v395
        %v623 = vpop.f32.mrb[0].mxu0
        %v624 = vadd.f32 0.0, %v623
        %v625 = vpop.f32.mrb[0].mxu0
        %v626 = vadd.f32 0.0, %v625
        %v627 = vpop.f32.mrb[0].mxu0
        %v628 = vpop.f32.mrb[0].mxu0
        %629 = vdwg.mxu0
        %630 = vmatprep.subr.bf16.mxu0 %v528
        %631 = vmatpush1.bf16.msra.mxu0 %v527
        %632 = vmatprep.subr.bf16.mxu0 %v532
        %633 = vmatpush1.bf16.msra.mxu0 %v531
        %634 = vmatprep.subr.bf16.mxu0 %v536
        %635 = vmatpush1.bf16.msra.mxu0 %v535
        %636 = vmatprep.subr.bf16.mxu0 %v540
        %637 = vmatpush1.bf16.msra.mxu0 %v539
        %638 = vmatprep.subr.bf16.mxu0 %v544
        %639 = vmatpush1.bf16.msra.mxu0 %v543
        %640 = vmatprep.subr.bf16.mxu0 %v548
        %641 = vmatpush1.bf16.msra.mxu0 %v547
        %642 = vmatprep.subr.bf16.mxu0 %v552
        %643 = vmatpush1.bf16.msra.mxu0 %v551
        %644 = vmatprep.subr.bf16.mxu0 %v556
        %645 = vmatpush1.bf16.msra.mxu0 %v555
        %646 = vmatprep.subr.bf16.mxu0 0
        %647 = vmatpush1.bf16.msra.mxu0 0
        %648 = vmatprep.subr.bf16.mxu0 0
        %649 = vmatpush1.bf16.msra.mxu0 0
        %650 = vmatprep.subr.bf16.mxu0 0
        %651 = vmatpush1.bf16.msra.mxu0 0
        %652 = vmatprep.subr.bf16.mxu0 0
        %653 = vmatpush1.bf16.msra.mxu0 0
        %654 = vmatprep.subr.bf16.mxu0 0
        %655 = vmatpush1.bf16.msra.mxu0 0
        %656 = vmatprep.subr.bf16.mxu0 0
        %657 = vmatpush1.bf16.msra.mxu0 0
        %658 = vmatprep.subr.bf16.mxu0 0
        %659 = vmatpush1.bf16.msra.mxu0 0
        %660 = vmatprep.subr.bf16.mxu0 0
        %661 = vmatpush1.bf16.msra.mxu0 0
        %662 = vmatprep.mubr.bf16.mxu0 0
        %663 = vmatmul.mubr.bf16.gmra.mrb[0].mxu0 %v395
        %v664 = vpop.f32.mrb[0].mxu0
        %v665 = vadd.f32 0.0, %v664
        %v666 = vpop.f32.mrb[0].mxu0
        %v667 = vadd.f32 0.0, %v666
        %v668 = vpop.f32.mrb[0].mxu0
        %v669 = vpop.f32.mrb[0].mxu0
        %670 = vdwg.mxu0
        %671 = vst [vmem:[%s279] sm:$0xff] %v624
        %672 = vst [vmem:[%s279 + $0x8] sm:$0xff] %v626
        %673 = vst [vmem:[%s279 + $0x10] sm:$0xff] %v665
        %674 = vst [vmem:[%s279 + $0x18] sm:$0xff] %v667
        %s675 = sand.u32 %s124, 1
        %s676 = scalar_lea.sflag [#allocation4], %s675
        %s677 = sand.u32 %s124, 1
        %s678 = smul.addr %s677, 4
        %s679 = scalar_lea.vmem [#allocation8], %s678
        %s680 = sand.u32 %s150, 1
        %s681 = scalar_lea.sflag [#allocation10], %s680
        %s682 = sand.u32 %s150, 1
        %s683 = smul.addr %s682, 32
        %s684 = scalar_lea.vmem [#allocation9], %s683
        // Predicated region
        $region49: #{tpu_custom_call.1} parent=35 // pred_check
          %p685 = pneg %p134
        $region50: #{tpu_custom_call.1} parent=35 // pred_check_branch
          %687 = sbr.rel (%p685) target = $region52
        $region51: #{tpu_custom_call.1} parent=35 // pred_region
          %s689 = ssub.s32 64, 64
          %690 = vsyncadd %s676, %s689
          %s691 = smul.addr %s27, 64
          %s692 = scalar_lea.hbm %s4, %s691
          %s694 = sshll.u32 %s679, 4
          %s695 = int_to_ptr.vmem [resolvable:$true] %s694
          %697 = dma.vmem_to_hbm [thread:$0]  %s695, 64, %s692, %s676
        $region52: #{tpu_custom_call.1} parent=35 // pred_fallthru
          _
        // Predicated region
        $region53: #{tpu_custom_call.1} parent=35 // pred_check
          %p698 = pneg %p160
        $region54: #{tpu_custom_call.1} parent=35 // pred_check_branch
          %700 = sbr.rel (%p698) target = $region56
        $region55: #{tpu_custom_call.1} parent=35 // pred_region
          %s702 = ssub.s32 512, 512
          %703 = vsyncadd %s681, %s702
          %s704 = smul.addr %s27, 4
          %s705 = smul.addr %s704, 128
          %s706 = scalar_lea.hbm %s5, %s705
          %s708 = sshll.u32 %s684, 4
          %s709 = int_to_ptr.vmem [resolvable:$true] %s708
          %711 = dma.vmem_to_hbm [thread:$0]  %s709, 512, %s706, %s681
        $region56: #{tpu_custom_call.1} parent=35 // pred_fallthru
          _
      $region36: #{tpu_custom_call.1} parent=5 // pred_fallthru
        _
      %p712 = scmp.le.s32.totalorder 2, %s22
      // Predicated region
      $region57: #{tpu_custom_call.1} parent=5 // pred_check
        %p713 = pneg %p712
      $region58: #{tpu_custom_call.1} parent=5 // pred_check_branch
        %715 = sbr.rel (%p713) target = $region60
      $region59: #{tpu_custom_call.1} parent=5 // pred_region
        %s716 = ssub.s32 %s22, 2
        // Predicated region
        $region61: #{tpu_custom_call.1} parent=59 // pred_check
          %p717 = pneg %p140
        $region62: #{tpu_custom_call.1} parent=59 // pred_check_branch
          %719 = sbr.rel (%p717) target = $region64
        $region63: #{tpu_custom_call.1} parent=59 // pred_region
          %s720 = sand.u32 %s125, 1
          %s721 = scalar_lea.sflag [#allocation4], %s720
          %s722 = sand.u32 %s125, 1
          %s723 = smul.addr %s722, 4
          %s724 = scalar_lea.vmem [#allocation8], %s723
          %725 = dma.done %s721, 64
        $region64: #{tpu_custom_call.1} parent=59 // pred_fallthru
          _
        // Predicated region
        $region65: #{tpu_custom_call.1} parent=59 // pred_check
          %p726 = pneg %p166
        $region66: #{tpu_custom_call.1} parent=59 // pred_check_branch
          %728 = sbr.rel (%p726) target = $region68
        $region67: #{tpu_custom_call.1} parent=59 // pred_region
          %s729 = sand.u32 %s151, 1
          %s730 = scalar_lea.sflag [#allocation10], %s729
          %s731 = sand.u32 %s151, 1
          %s732 = smul.addr %s731, 32
          %s733 = scalar_lea.vmem [#allocation9], %s732
          %734 = dma.done %s730, 512
        $region68: #{tpu_custom_call.1} parent=59 // pred_fallthru
          _
      $region60: #{tpu_custom_call.1} parent=5 // pred_fallthru
        _
    $region6: #{tpu_custom_call.1} parent=1 // loop_footer
      %s26 = sadd.s32 1, %s22
    $region7: #{tpu_custom_call.1} parent=1 // loop_footer_branch
      %21 = sbr.rel target = $region3
    $region8: #{tpu_custom_call.1} parent=1 // loop_exit
      _
    %735 = vsyncpa [#allocation3], 1
    %s736 = scalar_lea.sflag [#allocation3], 1
    %737 = vsyncpa %s736, 1
    %738 = vsyncpa [#allocation6], 1
    %739 = vsyncpa [#allocation4], 1
    %s740 = scalar_lea.sflag [#allocation4], 1
    %741 = vsyncpa %s740, 1
    %742 = vsyncpa [#allocation10], 1
    %s743 = scalar_lea.sflag [#allocation10], 1
    %744 = vsyncpa %s743, 1

</llo_original>
